<compile_context>
chip_gen: v7x
topology: tpu7x:2x2x1
jax: 0.10.0
libtpu: 0.0.40
codegen_flags: <defaults>
</compile_context>

<pallas_src>
import jax
import jax.numpy as jnp
from jax.experimental import pallas as pl
from jax.experimental.pallas import tpu as pltpu


def _layernorm_kernel(x_ref, scale_ref, shift_ref, o_ref):
    x = x_ref[...].astype(jnp.float32)                          # (tile_rows, D)
    d = x.shape[-1]
    mean = jnp.sum(x, axis=-1, keepdims=True) * (1.0 / d)       # (tile_rows, 1)
    centered = x - mean
    var = jnp.sum(centered * centered, axis=-1, keepdims=True) * (1.0 / d)  # unbiased=False
    inv_std = jax.lax.rsqrt(var + 1e-05)
    normalized = centered * inv_std
    scale = scale_ref[...].astype(jnp.float32)                  # (1, D)
    shift = shift_ref[...].astype(jnp.float32)                  # (1, D)
    o_ref[...] = (scale * normalized + shift).astype(o_ref.dtype)


def _vmem_capacity_bytes():
    """Physical VMEM per TensorCore; conservative 64 MiB fallback (v7x)."""
    try:
        info = pltpu.get_tpu_info()
        cap = getattr(info, "vmem_capacity_bytes", None)
        if cap:
            return int(cap)
    except Exception:
        pass
    return 64 * 1024 * 1024


def _pick_tile_rows(rows, d, io_dtype, vmem_cap):
    itemsize = jnp.dtype(io_dtype).itemsize
    # sublane granularity: 8 for f32, 16 for bf16, 32 for 8-bit types
    sublane = max(8, 32 // itemsize)
    if rows <= sublane:
        return rows  # block equals full row dim; always legal

    # ~50% of VMEM for the double-buffered in+out tiles plus an f32 temp copy.
    budget = int(vmem_cap * 0.5)
    bytes_per_row = 2 * d * (2 * itemsize) + d * 4
    max_rows = max(sublane, budget // max(bytes_per_row, 1))

    tile = min(rows, 1024, max_rows)
    tile = max(sublane, (tile // sublane) * sublane)

    # Keep a few grid steps when rows are plentiful so v7x's 2 TCs (and the
    # software pipeline) stay busy -- but never shrink tiles below 256 rows
    # just for occupancy.
    if rows > 4 * sublane:
        occ_tile = ((pl.cdiv(rows, 4) + sublane - 1) // sublane) * sublane
        if occ_tile >= 256:
            tile = min(tile, occ_tile)
    return tile


def _vmem_limit_bytes(tile_rows, d, io_dtype, param_dtype, vmem_cap):
    itemsize = jnp.dtype(io_dtype).itemsize
    tiles = 2 * tile_rows * d * (2 * itemsize)          # double-buffered x + out tiles
    temps = tile_rows * d * 4                           # f32 working copy in-kernel
    params = 2 * 2 * d * jnp.dtype(param_dtype).itemsize
    working = tiles + temps + params
    return int(min(max(int(working * 1.5), 32 << 20), int(vmem_cap * 0.9)))


def layer_normalization(x, scale, shift, *, tile_rows=None):
    """x: (..., D) float array (f32 or bf16); scale/shift: (D,). Returns same shape/dtype as x."""
    orig_shape = x.shape
    d = orig_shape[-1]
    rows = 1
    for s in orig_shape[:-1]:
        rows *= s
    x2 = x.reshape(rows, d)
    scale2 = scale.reshape(1, d)
    shift2 = shift.reshape(1, d)

    vmem_cap = _vmem_capacity_bytes()
    if tile_rows is None:
        tile_rows = _pick_tile_rows(rows, d, x.dtype, vmem_cap)
    tile_rows = min(tile_rows, rows)

    grid = (pl.cdiv(rows, tile_rows),)   # ragged tail handled by Pallas masking

    out = pl.pallas_call(
        _layernorm_kernel,
        out_shape=jax.ShapeDtypeStruct((rows, d), x.dtype),
        grid_spec=pltpu.PrefetchScalarGridSpec(
            num_scalar_prefetch=0,
            grid=grid,
            in_specs=[
                pl.BlockSpec((tile_rows, d), lambda i: (i, 0)),
                pl.BlockSpec((1, d), lambda i: (0, 0)),
                pl.BlockSpec((1, d), lambda i: (0, 0)),
            ],
            out_specs=pl.BlockSpec((tile_rows, d), lambda i: (i, 0)),
        ),
        compiler_params=pltpu.CompilerParams(
            dimension_semantics=("parallel",),
            vmem_limit_bytes=_vmem_limit_bytes(tile_rows, d, x.dtype, scale.dtype, vmem_cap),
        ),
    )(x2, scale2, shift2)
    return out.reshape(orig_shape)


def _reference(x, scale, shift):
    mean = jnp.mean(x, axis=-1, keepdims=True)
    var = jnp.mean((x - mean) ** 2, axis=-1, keepdims=True)
    return scale * ((x - mean) / jnp.sqrt(var + 1e-05)) + shift


if __name__ == "__main__":
    key = jax.random.PRNGKey(0)
    batch, seq, embed = 2, 8, 256  # lane-dense last dim (multiple of 128)

    x = jax.random.normal(key, (batch, seq, embed), dtype=jnp.float32)
    # Deterministic parameter init matching nn.Parameter(torch.ones / torch.zeros)
    scale = jnp.ones((embed,), dtype=jnp.float32)
    shift = jnp.zeros((embed,), dtype=jnp.float32)

    out = jax.block_until_ready(layer_normalization(x, scale, shift))
    ref = _reference(x, scale, shift)
    assert jnp.allclose(out, ref, atol=1e-5, rtol=1e-5), "f32 mismatch vs reference"

    # Ragged row count (batch*seq not a multiple of the tile) exercises the cdiv tail.
    xr = jax.random.normal(jax.random.PRNGKey(1), (3, 7, embed), dtype=jnp.float32)
    outr = jax.block_until_ready(layer_normalization(xr, scale, shift))
    refr = _reference(xr, scale, shift)
    assert jnp.allclose(outr, refr, atol=1e-5, rtol=1e-5), "ragged mismatch vs reference"

    # bf16 streaming path: halves HBM traffic; math is still f32 inside the kernel.
    xb = x.astype(jnp.bfloat16)
    outb = jax.block_until_ready(layer_normalization(xb, scale, shift))
    refb = _reference(xb.astype(jnp.float32), scale, shift)
    assert jnp.allclose(outb.astype(jnp.float32), refb, atol=5e-2, rtol=5e-2), "bf16 mismatch"

    print("KERNEL_OK")
</pallas_src>

<mosaic_0001>
module attributes {stable_mosaic.version = 11 : i64} {
  func.func @_layernorm_kernel(%arg0: i32, %arg1: memref<16x256xf32, #tpu.memory_space<vmem>>, %arg2: memref<1x256xf32, #tpu.memory_space<vmem>>, %arg3: memref<1x256xf32, #tpu.memory_space<vmem>>, %arg4: memref<16x256xf32, #tpu.memory_space<vmem>>) attributes {dimension_semantics = [#tpu.dimension_semantics<parallel>], iteration_bounds = array<i64: 1>, scalar_prefetch = 0 : i64, scratch_operands = 0 : i64, tpu.core_type = #tpu.core_type<tc>, window_params = [{transform_indices = @transform_0, window_bounds = array<i64: 16, 256>}, {pipeline_mode = #tpu.pipeline_mode<synchronous>, transform_indices = @transform_1, window_bounds = array<i64: 1, 256>}, {pipeline_mode = #tpu.pipeline_mode<synchronous>, transform_indices = @transform_2, window_bounds = array<i64: 1, 256>}, {transform_indices = @transform_3, window_bounds = array<i64: 16, 256>}]} {
    %c0 = arith.constant 0 : index
    %c0_0 = arith.constant 0 : index
    %0 = vector.load %arg1[%c0, %c0_0] : memref<16x256xf32, #tpu.memory_space<vmem>>, vector<16x256xf32>
    %cst = arith.constant dense<0.000000e+00> : vector<16xf32>
    %1 = vector.multi_reduction <add>, %0, %cst [1] : vector<16x256xf32> to vector<16xf32>
    %2 = vector.shape_cast %1 : vector<16xf32> to vector<16x1xf32>
    %cst_1 = arith.constant 3.906250e-03 : f32
    %3 = vector.broadcast %cst_1 : f32 to vector<16x1xf32>
    %4 = arith.mulf %2, %3 : vector<16x1xf32>
    %5 = vector.broadcast %4 : vector<16x1xf32> to vector<16x256xf32>
    %6 = arith.subf %0, %5 : vector<16x256xf32>
    %7 = arith.mulf %6, %6 : vector<16x256xf32>
    %cst_2 = arith.constant dense<0.000000e+00> : vector<16xf32>
    %8 = vector.multi_reduction <add>, %7, %cst_2 [1] : vector<16x256xf32> to vector<16xf32>
    %9 = vector.shape_cast %8 : vector<16xf32> to vector<16x1xf32>
    %cst_3 = arith.constant 3.906250e-03 : f32
    %10 = vector.broadcast %cst_3 : f32 to vector<16x1xf32>
    %11 = arith.mulf %9, %10 : vector<16x1xf32>
    %cst_4 = arith.constant 9.99999974E-6 : f32
    %12 = vector.broadcast %cst_4 : f32 to vector<16x1xf32>
    %13 = arith.addf %11, %12 : vector<16x1xf32>
    %14 = math.rsqrt %13 : vector<16x1xf32>
    %15 = vector.broadcast %14 : vector<16x1xf32> to vector<16x256xf32>
    %16 = arith.mulf %6, %15 : vector<16x256xf32>
    %c0_5 = arith.constant 0 : index
    %c0_6 = arith.constant 0 : index
    %17 = vector.load %arg2[%c0_5, %c0_6] : memref<1x256xf32, #tpu.memory_space<vmem>>, vector<1x256xf32>
    %c0_7 = arith.constant 0 : index
    %c0_8 = arith.constant 0 : index
    %18 = vector.load %arg3[%c0_7, %c0_8] : memref<1x256xf32, #tpu.memory_space<vmem>>, vector<1x256xf32>
    %19 = vector.broadcast %17 : vector<1x256xf32> to vector<16x256xf32>
    %20 = arith.mulf %19, %16 : vector<16x256xf32>
    %21 = vector.broadcast %18 : vector<1x256xf32> to vector<16x256xf32>
    %22 = arith.addf %20, %21 : vector<16x256xf32>
    %c0_9 = arith.constant 0 : index
    %c0_10 = arith.constant 0 : index
    %23 = vector.load %arg4[%c0_9, %c0_10] : memref<16x256xf32, #tpu.memory_space<vmem>>, vector<16x256xf32>
    tpu.vector_store %arg4[%c0_9, %c0_10], %22 {strides = array<i32>} : memref<16x256xf32, #tpu.memory_space<vmem>>, vector<16x256xf32>,
    return
  }
  func.func @transform_0(%arg0: i32) -> (i32, i32) {
    %c0_i32 = arith.constant 0 : i32
    %c0_i32_0 = arith.constant 0 : i32
    return %arg0, %c0_i32 : i32, i32
  }
  func.func @transform_1(%arg0: i32) -> (i32, i32) {
    %c0_i32 = arith.constant 0 : i32
    %c0_i32_0 = arith.constant 0 : i32
    %c0_i32_1 = arith.constant 0 : i32
    return %c0_i32, %c0_i32_0 : i32, i32
  }
  func.func @transform_2(%arg0: i32) -> (i32, i32) {
    %c0_i32 = arith.constant 0 : i32
    %c0_i32_0 = arith.constant 0 : i32
    %c0_i32_1 = arith.constant 0 : i32
    return %c0_i32, %c0_i32_0 : i32, i32
  }
  func.func @transform_3(%arg0: i32) -> (i32, i32) {
    %c0_i32 = arith.constant 0 : i32
    %c0_i32_0 = arith.constant 0 : i32
    return %arg0, %c0_i32 : i32, i32
  }
}

</mosaic_0001>

<llo_original>
// kernel: tpu_custom_call.1
$region0: #{tpu_custom_call.1}
  #allocation0 [shape = 'u32[]', space=smem, size = 0x4, offset = 0x4, fixed_abs, tag = 'smem constant byte address 0x4 - core index']
  #allocation1 [shape = 'u32[144,128]{1,0:T(1,128)}', space=vmem, size = 0x12000, scoped, tag = 'internal scratch']
  %s0 = inlined_call_operand.hbm [shape: f32[16,256], index: 0, kind: input, shape index: {}]
  %s1 = inlined_call_operand.vmem [shape: f32[1,256], index: 1, kind: input, shape index: {}]
  %s2 = inlined_call_operand.vmem [shape: f32[1,256], index: 2, kind: input, shape index: {}]
  %s3 = inlined_call_operand.hbm [shape: f32[16,256], index: 3, kind: output, shape index: {}]
  %s4 = sld [smem:[#allocation0]]
  $region26: #{tpu_custom_call.1} parent=0
    _
  %s6 = ssub.s32 1, %s4
  %s7 = scalar_select 0, %s6, %s4
  $region1: #{tpu_custom_call.1} parent=0
    #allocation2 [shape = 'u8[16384]{0}', space=vmem, size = 0x4000, scoped, tag = 'input window, operand 0, single buffered']
    #allocation3 [shape = 's32[1]{0}', space=sflag, size = 0x4, scoped, tag = 'scoped memory for tpu_custom_call.1']
    #allocation4 [shape = 's32[1]{0}', space=sflag, size = 0x4, scoped, tag = 'scoped memory for tpu_custom_call.1']
    #allocation5 [shape = 'u8[16384]{0}', space=vmem, size = 0x4000, scoped, tag = 'output window, operand 0, single buffered']
    %8 = vsyncpa [#allocation3], 0
    %9 = vsyncpa [#allocation4], 0
    // Predicated region
    $region2: #{tpu_custom_call.1} parent=1 // pred_check
      _
    $region3: #{tpu_custom_call.1} parent=1 // pred_check_branch
      %11 = sbr.rel (0) target = $region5
    $region4: #{tpu_custom_call.1} parent=1 // pred_region
      %s13 = ssub.s32 512, 512
      %14 = vsyncadd [#allocation3], %s13
      %s15 = sshll.u32 [#allocation2], 4
      %s16 = int_to_ptr.vmem [resolvable:$true] %s15
      %21 = dma.hbm_to_vmem [thread:$0]  %s0, 512, %s16, [#allocation3], 256, 256, 16
    $region5: #{tpu_custom_call.1} parent=1 // pred_fallthru
      _
    // Predicated region
    $region6: #{tpu_custom_call.1} parent=1 // pred_check
      _
    $region7: #{tpu_custom_call.1} parent=1 // pred_check_branch
      %23 = sbr.rel (0) target = $region9
    $region8: #{tpu_custom_call.1} parent=1 // pred_region
      _
    $region9: #{tpu_custom_call.1} parent=1 // pred_fallthru
      _
    // Predicated region
    $region10: #{tpu_custom_call.1} parent=1 // pred_check
      _
    $region11: #{tpu_custom_call.1} parent=1 // pred_check_branch
      %25 = sbr.rel (0) target = $region13
    $region12: #{tpu_custom_call.1} parent=1 // pred_region
      _
    $region13: #{tpu_custom_call.1} parent=1 // pred_fallthru
      _
    // Predicated region
    $region14: #{tpu_custom_call.1} parent=1 // pred_check
      _
    $region15: #{tpu_custom_call.1} parent=1 // pred_check_branch
      %27 = sbr.rel (0) target = $region17
    $region16: #{tpu_custom_call.1} parent=1 // pred_region
      %28 = dma.done [#allocation3], 512
    $region17: #{tpu_custom_call.1} parent=1 // pred_fallthru
      _
    %v29 = vld [vmem:[#allocation2] sm:$0xff]
    %v30 = vld [vmem:[#allocation2 + $0x8] sm:$0xff]
    %v31 = vld [vmem:[#allocation2 + $0x10] sm:$0xff]
    %v32 = vld [vmem:[#allocation2 + $0x18] sm:$0xff]
    %v33 = vadd.f32 %v29, %v30
    %34 = vadd.xlane.f32.xlu0 %v33
    %v35 = vpop.xlane.xlu0 %34
    %v36 = vadd.f32 %v31, %v32
    %37 = vadd.xlane.f32.xlu0 %v36
    %v38 = vpop.xlane.xlu0 %37
    %v39 = vmul.f32 %v35, 0.00390625
    %v40 = vmul.f32 %v38, 0.00390625
    %v41 = vsub.f32 %v29, %v39
    %v42 = vsub.f32 %v30, %v39
    %v43 = vsub.f32 %v31, %v40
    %v44 = vsub.f32 %v32, %v40
    %v45 = vmul.f32 %v41, %v41
    %v46 = vmul.f32 %v42, %v42
    %v47 = vmul.f32 %v43, %v43
    %v48 = vmul.f32 %v44, %v44
    %v49 = vadd.f32 %v45, %v46
    %50 = vadd.xlane.f32.xlu0 %v49
    %v51 = vpop.xlane.xlu0 %50
    %v52 = vadd.f32 %v47, %v48
    %53 = vadd.xlane.f32.xlu0 %v52
    %v54 = vpop.xlane.xlu0 %53
    %v55 = vmul.f32 %v51, 0.00390625
    %v56 = vmul.f32 %v54, 0.00390625
    %v57 = vadd.f32 %v55, 1e-05
    %v58 = vadd.f32 %v56, 1e-05
    %v59 = vrsqrt.pop %v57
    %v60 = vrsqrt.pop %v58
    %v61 = vmul.f32 %v41, %v59
    %v62 = vmul.f32 %v42, %v59
    %v63 = vmul.f32 %v43, %v60
    %v64 = vmul.f32 %v44, %v60
    %v65 = vld [vmem:[%s1] sm:$0x3]
    %v66 = vld [vmem:[%s2] sm:$0x3]
    %v68 = vlaneseq
    %v69 = vshrl.u32 %v68, 7
    %v70 = vsub.s32 0, %v69
    %v71 = vrot.slane %v65, %v70
    %v72 = vlaneseq
    %v73 = vshrl.u32 %v72, 7
    %v74 = vsub.s32 1, %v73
    %v75 = vrot.slane %v65, %v74
    %v78 = vmul.f32 %v71, %v61
    %v79 = vmul.f32 %v75, %v62
    %v80 = vmul.f32 %v71, %v63
    %v81 = vmul.f32 %v75, %v64
    %v83 = vlaneseq
    %v84 = vshrl.u32 %v83, 7
    %v85 = vsub.s32 0, %v84
    %v86 = vrot.slane %v66, %v85
    %v87 = vlaneseq
    %v88 = vshrl.u32 %v87, 7
    %v89 = vsub.s32 1, %v88
    %v90 = vrot.slane %v66, %v89
    %v93 = vadd.f32 %v78, %v86
    %v94 = vadd.f32 %v79, %v90
    %v95 = vadd.f32 %v80, %v86
    %v96 = vadd.f32 %v81, %v90
    %97 = vst [vmem:[#allocation5] sm:$0xff] %v93
    %98 = vst [vmem:[#allocation5 + $0x8] sm:$0xff] %v94
    %99 = vst [vmem:[#allocation5 + $0x10] sm:$0xff] %v95
    %100 = vst [vmem:[#allocation5 + $0x18] sm:$0xff] %v96
    // Predicated region
    $region18: #{tpu_custom_call.1} parent=1 // pred_check
      _
    $region19: #{tpu_custom_call.1} parent=1 // pred_check_branch
      %102 = sbr.rel (0) target = $region21
    $region20: #{tpu_custom_call.1} parent=1 // pred_region
      %s104 = ssub.s32 512, 512
      %105 = vsyncadd [#allocation4], %s104
      %s106 = sshll.u32 [#allocation5], 4
      %s107 = int_to_ptr.vmem [resolvable:$true] %s106
      %112 = dma.vmem_to_hbm [thread:$0]  %s107, 512, %s3, [#allocation4], 256, 256, 16
    $region21: #{tpu_custom_call.1} parent=1 // pred_fallthru
      _
    // Predicated region
    $region22: #{tpu_custom_call.1} parent=1 // pred_check
      _
    $region23: #{tpu_custom_call.1} parent=1 // pred_check_branch
      %114 = sbr.rel (0) target = $region25
    $region24: #{tpu_custom_call.1} parent=1 // pred_region
      %115 = dma.done [#allocation4], 512
    $region25: #{tpu_custom_call.1} parent=1 // pred_fallthru
      _
    %116 = vsyncpa [#allocation3], 1
    %117 = vsyncpa [#allocation4], 1

</llo_original>
